<compile_context>
chip_gen: v7x
topology: tpu7x:2x2x1
jax: 0.10.0
libtpu: 0.0.40
codegen_flags: <defaults>
</compile_context>

<pallas_src>
import jax
import jax.numpy as jnp
from jax.experimental import pallas as pl
from jax.experimental.pallas import tpu as pltpu


def _round_up(x: int, m: int) -> int:
    return ((x + m - 1) // m) * m


def _make_dqn_kernel(n_layers: int, n_act: int, lanes: int, emit_q: bool):
    """Fused MLP + greedy-argmax kernel.

    Ref order: x, (w0, b0), ..., [q_out], action_out.
    """

    def kernel(*refs):
        x_ref = refs[0]
        param_refs = refs[1:1 + 2 * n_layers]
        if emit_q:
            q_ref, a_ref = refs[1 + 2 * n_layers:]
        else:
            (a_ref,) = refs[1 + 2 * n_layers:]

        h = x_ref[...]
        for i in range(n_layers):
            if i > 0:
                h = jnp.maximum(h, 0.0)  # ReLU between layers (f32 VPU, v5e-safe)
            w = param_refs[2 * i][...]
            b = param_refs[2 * i + 1][...].astype(jnp.float32)
            # Single cast of the activations to the weight dtype (bf16) -> MXU
            # full rate; accumulate + bias in f32.
            h = jnp.dot(h.astype(w.dtype), w,
                        preferred_element_type=jnp.float32) + b

        if emit_q:
            q_ref[...] = h.astype(q_ref.dtype)

        # Lane-dense greedy action selection.  Re-chunk the batch rows
        # (tb, n_act) -> (tb/lanes, lanes, n_act): the minor dim is unchanged
        # and the split lands on sublane-tile boundaries, so this is a free
        # vreg re-chunk.  Reducing over the lane axis then yields a
        # (tb/lanes, lanes) lane-major action tile that stores densely.
        tb = h.shape[0]
        h3 = h.reshape(tb // lanes, lanes, n_act)
        idx = jax.lax.broadcasted_iota(jnp.int32, h3.shape, 2)
        max_q = jnp.max(h3, axis=-1, keepdims=True)
        # First-index argmax via one cross-lane min.  Fill with n_act - 1 so the
        # result stays in range even for an all-NaN row (lax.argmax's variadic
        # reduce is not a safe Mosaic lowering, so keep the iota/where idiom).
        acts = jnp.min(jnp.where(h3 == max_q, idx, n_act - 1), axis=-1)
        a_ref[...] = acts.astype(jnp.int32)

    return kernel


def _choose_tile(padded8: int, block_batch: int) -> int:
    """Batch tile: <= block_batch rows, >= 2 grid steps when possible (keeps
    both v7x TensorCores busy), multiple of 8; rounded to a multiple of 128
    once large enough so the action output can be stored lane-dense."""
    tb = min(block_batch, _round_up(pl.cdiv(padded8, 2), 8))
    tb = max(tb, 8)
    if tb >= 128:
        tb = _round_up(tb, 128)
    return tb


def _vmem_budget_bytes(tb, widths, x_itemsize, q_itemsize, return_q, flat_params):
    """Generous per-call VMEM budget (double buffers + intermediates + params),
    with 128-lane padding accounted for. Floor 16 MiB, cap 64 MiB (v7x)."""
    def tile(rows, cols, itemsize):
        return rows * _round_up(max(cols, 1), 128) * itemsize

    est = 2 * tile(tb, widths[0], x_itemsize)            # states, double-buffered
    est += 2 * tile(pl.cdiv(tb, 128), 128, 4)            # lane-dense action tile
    if return_q:
        est += 2 * tile(tb, widths[-1], q_itemsize)      # q tile
    est += 3 * tile(tb, max(widths), 4)                  # f32 activations
    est += 2 * tile(tb, max(widths), 2)                  # bf16 matmul operands
    est += 2 * sum(tile(p.shape[0], p.shape[1], p.dtype.itemsize)
                   for p in flat_params)                 # resident weights/biases
    est = int(est * 1.5) + (2 << 20)
    return max(16 << 20, min(est, 64 << 20))


def dqn_forward(states, params, *, block_batch: int = 4096,
                return_q: bool = True, q_dtype=jnp.float32):
    """Run the DQN forward pass in one Pallas kernel.

    states: [batch, state_dim] float32 (bf16 also accepted; halves the DMA).
    params: list of (W [in, out], b [1, out]) tuples, one per Linear layer.
    Returns (q_values [batch, n_actions], greedy_actions [batch] int32) when
    return_q, else just greedy_actions (cheaper acting path: no Q writeback).
    """
    n_layers = len(params)
    batch, state_dim = states.shape
    n_actions = params[-1][0].shape[1]

    # Pad only to a multiple of 8 sublanes (<= 7 rows); the last grid block may
    # be ragged instead of padding the whole array to a multiple of the tile.
    padded8 = _round_up(batch, 8)
    if padded8 != batch:
        states = jnp.pad(states, ((0, padded8 - batch), (0, 0)))

    tb = _choose_tile(padded8, block_batch)
    lanes = 128 if tb % 128 == 0 else 8      # lane width of the action output
    grid_b = pl.cdiv(padded8, tb)
    rows_out = grid_b * tb                   # outputs sized to whole tiles

    flat_params = [p for wb in params for p in wb]

    # States/outputs are tiled over the batch grid; weights/biases use a
    # constant block index so they are DMA'd once and stay VMEM-resident
    # (~27 KB total).  TODO(synk): pipeline_mode=pl.Buffered(1) on the param
    # specs would drop their redundant second buffer (~27 KB) — negligible vs
    # the multi-MB tile budget, so left as the default.
    in_specs = [pl.BlockSpec((tb, state_dim), lambda i: (i, 0))]
    in_specs += [pl.BlockSpec(p.shape, lambda i: (0, 0)) for p in flat_params]

    a_spec = pl.BlockSpec((None, tb // lanes, lanes), lambda i: (i, 0, 0))
    a_shape = jax.ShapeDtypeStruct((grid_b, tb // lanes, lanes), jnp.int32)
    if return_q:
        out_specs = (pl.BlockSpec((tb, n_actions), lambda i: (i, 0)), a_spec)
        out_shape = (jax.ShapeDtypeStruct((rows_out, n_actions), q_dtype),
                     a_shape)
    else:
        out_specs = a_spec
        out_shape = a_shape

    widths = [state_dim] + [w.shape[1] for w, _ in params]
    vmem_limit = _vmem_budget_bytes(tb, widths, states.dtype.itemsize,
                                    jnp.dtype(q_dtype).itemsize, return_q,
                                    flat_params)

    out = pl.pallas_call(
        _make_dqn_kernel(n_layers, n_actions, lanes, return_q),
        grid=(grid_b,),
        in_specs=in_specs,
        out_specs=out_specs,
        out_shape=out_shape,
        compiler_params=pltpu.CompilerParams(
            dimension_semantics=("parallel",),   # shard batch tiles across TCs
            vmem_limit_bytes=vmem_limit,
        ),
    )(states, *flat_params)

    # TODO(synk): epsilon-greedy exploration mixing (DQN.get_epsilon) uses host
    # numpy RNG; it stays outside the kernel.
    if return_q:
        q, a = out
        return q[:batch], a.reshape(-1)[:batch]
    return out.reshape(-1)[:batch]


def init_dqn_params(key, state_dim, n_actions, hidden_layers,
                    weight_dtype=jnp.bfloat16):
    """Deterministic init mirroring torch.nn.Linear defaults:
    W, b ~ U(-1/sqrt(in_dim), 1/sqrt(in_dim)). W stored as [in, out].
    Weights in bf16 (halves DMA, full-rate MXU); biases kept f32."""
    layers = [state_dim, *hidden_layers, n_actions]
    params = []
    for i in range(len(layers) - 1):
        in_dim, out_dim = layers[i], layers[i + 1]
        key, kw, kb = jax.random.split(key, 3)
        bound = 1.0 / (in_dim ** 0.5)
        w = jax.random.uniform(kw, (in_dim, out_dim), jnp.float32, -bound, bound)
        b = jax.random.uniform(kb, (1, out_dim), jnp.float32, -bound, bound)
        params.append((w.astype(weight_dtype), b))
    return params


def dqn_forward_ref(states, params):
    """Pure-JAX reference matching the kernel's cast pattern."""
    h = states
    for i, (w, b) in enumerate(params):
        if i > 0:
            h = jnp.maximum(h, 0.0)
        h = jnp.dot(h.astype(w.dtype), w,
                    preferred_element_type=jnp.float32) + b.astype(jnp.float32)
    return h


if __name__ == "__main__":
    # Shapes consistent with the module: state_dim=32, hidden=[64, 64],
    # n_actions=8.
    state_dim, n_actions, hidden_layers = 32, 8, [64, 64]

    key = jax.random.PRNGKey(0)
    key, kx1, kx2 = jax.random.split(key, 3)
    params = init_dqn_params(key, state_dim, n_actions, hidden_layers)

    # 1) Tiny batch (not a multiple of 8): exercises the pad-to-8 path and the
    #    single-tile / narrow-lane fallback.
    s_small = jax.random.normal(kx1, (5, state_dim), dtype=jnp.float32)
    q1, a1 = dqn_forward(s_small, params)
    q1 = jax.block_until_ready(q1)
    a1 = jax.block_until_ready(a1)
    ref1 = dqn_forward_ref(s_small, params)
    assert q1.shape == (5, n_actions) and a1.shape == (5,)
    assert jnp.allclose(q1, ref1, atol=1e-3, rtol=1e-3)
    assert jnp.array_equal(a1, jnp.argmax(q1, axis=-1))

    # 2) Replay-buffer-style batch: multi-step grid, ragged last block and
    #    lane-dense action output.  block_batch is kept small here only so the
    #    demo exercises >1 grid step at a small shape (default is 4096).
    s_big = jax.random.normal(kx2, (1000, state_dim), dtype=jnp.float32)
    q2, a2 = dqn_forward(s_big, params, block_batch=512)
    q2 = jax.block_until_ready(q2)
    a2 = jax.block_until_ready(a2)
    ref2 = dqn_forward_ref(s_big, params)
    assert q2.shape == (1000, n_actions) and a2.shape == (1000,)
    assert jnp.allclose(q2, ref2, atol=1e-3, rtol=1e-3)
    assert jnp.array_equal(a2, jnp.argmax(q2, axis=-1))

    # 3) Pure acting path: greedy actions only, no Q-value writeback.
    a3 = dqn_forward(s_big, params, block_batch=512, return_q=False)
    a3 = jax.block_until_ready(a3)
    assert jnp.array_equal(a3, a2)

    print("KERNEL_OK")
</pallas_src>

<mosaic_0001>
module attributes {stable_mosaic.version = 11 : i64} {
  func.func @kernel(%arg0: i32, %arg1: memref<8x32xf32, #tpu.memory_space<vmem>>, %arg2: memref<32x64xbf16, #tpu.memory_space<vmem>>, %arg3: memref<1x64xf32, #tpu.memory_space<vmem>>, %arg4: memref<64x64xbf16, #tpu.memory_space<vmem>>, %arg5: memref<1x64xf32, #tpu.memory_space<vmem>>, %arg6: memref<64x8xbf16, #tpu.memory_space<vmem>>, %arg7: memref<1x8xf32, #tpu.memory_space<vmem>>, %arg8: memref<8x8xf32, #tpu.memory_space<vmem>>, %arg9: memref<1x1x8xi32, #tpu.memory_space<vmem>>) attributes {dimension_semantics = [#tpu.dimension_semantics<parallel>], iteration_bounds = array<i64: 1>, scalar_prefetch = 0 : i64, scratch_operands = 0 : i64, tpu.core_type = #tpu.core_type<tc>, window_params = [{transform_indices = @transform_0, window_bounds = array<i64: 8, 32>}, {pipeline_mode = #tpu.pipeline_mode<synchronous>, transform_indices = @transform_1, window_bounds = array<i64: 32, 64>}, {pipeline_mode = #tpu.pipeline_mode<synchronous>, transform_indices = @transform_2, window_bounds = array<i64: 1, 64>}, {pipeline_mode = #tpu.pipeline_mode<synchronous>, transform_indices = @transform_3, window_bounds = array<i64: 64, 64>}, {pipeline_mode = #tpu.pipeline_mode<synchronous>, transform_indices = @transform_4, window_bounds = array<i64: 1, 64>}, {pipeline_mode = #tpu.pipeline_mode<synchronous>, transform_indices = @transform_5, window_bounds = array<i64: 64, 8>}, {pipeline_mode = #tpu.pipeline_mode<synchronous>, transform_indices = @transform_6, window_bounds = array<i64: 1, 8>}, {transform_indices = @transform_7, window_bounds = array<i64: 8, 8>}, {transform_indices = @transform_8, window_bounds = array<i64: 1, 1, 8>}]} {
    %c0 = arith.constant 0 : index
    %c0_0 = arith.constant 0 : index
    %0 = vector.load %arg1[%c0, %c0_0] : memref<8x32xf32, #tpu.memory_space<vmem>>, vector<8x32xf32>
    %c0_1 = arith.constant 0 : index
    %c0_2 = arith.constant 0 : index
    %1 = vector.load %arg2[%c0_1, %c0_2] : memref<32x64xbf16, #tpu.memory_space<vmem>>, vector<32x64xbf16>
    %c0_3 = arith.constant 0 : index
    %c0_4 = arith.constant 0 : index
    %2 = vector.load %arg3[%c0_3, %c0_4] : memref<1x64xf32, #tpu.memory_space<vmem>>, vector<1x64xf32>
    %3 = arith.truncf %0 : vector<8x32xf32> to vector<8x32xbf16>
    %cst = arith.constant dense<0.000000e+00> : vector<8x64xf32>
    %4 = tpu.matmul %3, %1, %cst {dimension_numbers = #tpu.dot_dimension_numbers<[1], [0], [0], [1], [0, 0, 1, 1], [], []>} : vector<8x32xbf16>, vector<32x64xbf16>, vector<8x64xf32> -> vector<8x64xf32>
    %5 = vector.broadcast %2 : vector<1x64xf32> to vector<8x64xf32>
    %6 = arith.addf %4, %5 : vector<8x64xf32>
    %cst_5 = arith.constant 0.000000e+00 : f32
    %7 = vector.broadcast %cst_5 : f32 to vector<8x64xf32>
    %8 = arith.maximumf %6, %7 : vector<8x64xf32>
    %c0_6 = arith.constant 0 : index
    %c0_7 = arith.constant 0 : index
    %9 = vector.load %arg4[%c0_6, %c0_7] : memref<64x64xbf16, #tpu.memory_space<vmem>>, vector<64x64xbf16>
    %c0_8 = arith.constant 0 : index
    %c0_9 = arith.constant 0 : index
    %10 = vector.load %arg5[%c0_8, %c0_9] : memref<1x64xf32, #tpu.memory_space<vmem>>, vector<1x64xf32>
    %11 = arith.truncf %8 : vector<8x64xf32> to vector<8x64xbf16>
    %cst_10 = arith.constant dense<0.000000e+00> : vector<8x64xf32>
    %12 = tpu.matmul %11, %9, %cst_10 {dimension_numbers = #tpu.dot_dimension_numbers<[1], [0], [0], [1], [0, 0, 1, 1], [], []>} : vector<8x64xbf16>, vector<64x64xbf16>, vector<8x64xf32> -> vector<8x64xf32>
    %13 = vector.broadcast %10 : vector<1x64xf32> to vector<8x64xf32>
    %14 = arith.addf %12, %13 : vector<8x64xf32>
    %cst_11 = arith.constant 0.000000e+00 : f32
    %15 = vector.broadcast %cst_11 : f32 to vector<8x64xf32>
    %16 = arith.maximumf %14, %15 : vector<8x64xf32>
    %c0_12 = arith.constant 0 : index
    %c0_13 = arith.constant 0 : index
    %17 = vector.load %arg6[%c0_12, %c0_13] : memref<64x8xbf16, #tpu.memory_space<vmem>>, vector<64x8xbf16>
    %c0_14 = arith.constant 0 : index
    %c0_15 = arith.constant 0 : index
    %18 = vector.load %arg7[%c0_14, %c0_15] : memref<1x8xf32, #tpu.memory_space<vmem>>, vector<1x8xf32>
    %19 = arith.truncf %16 : vector<8x64xf32> to vector<8x64xbf16>
    %cst_16 = arith.constant dense<0.000000e+00> : vector<8x8xf32>
    %20 = tpu.matmul %19, %17, %cst_16 {dimension_numbers = #tpu.dot_dimension_numbers<[1], [0], [0], [1], [0, 0, 1, 1], [], []>} : vector<8x64xbf16>, vector<64x8xbf16>, vector<8x8xf32> -> vector<8x8xf32>
    %21 = vector.broadcast %18 : vector<1x8xf32> to vector<8x8xf32>
    %22 = arith.addf %20, %21 : vector<8x8xf32>
    %c0_17 = arith.constant 0 : index
    %c0_18 = arith.constant 0 : index
    %23 = vector.load %arg8[%c0_17, %c0_18] : memref<8x8xf32, #tpu.memory_space<vmem>>, vector<8x8xf32>
    tpu.vector_store %arg8[%c0_17, %c0_18], %22 {strides = array<i32>} : memref<8x8xf32, #tpu.memory_space<vmem>>, vector<8x8xf32>,
    %24 = vector.shape_cast %22 : vector<8x8xf32> to vector<1x8x8xf32>
    %25 = tpu.iota {dimensions = array<i32: 2>} : vector<1x8x8xi32>
    %cst_19 = arith.constant dense<0xFF800000> : vector<1x8xf32>
    %26 = vector.multi_reduction <maximumf>, %24, %cst_19 [2] : vector<1x8x8xf32> to vector<1x8xf32>
    %27 = vector.shape_cast %26 : vector<1x8xf32> to vector<1x8x1xf32>
    %28 = vector.broadcast %27 : vector<1x8x1xf32> to vector<1x8x8xf32>
    %29 = arith.cmpf oeq, %24, %28 : vector<1x8x8xf32>
    %c7_i32 = arith.constant 7 : i32
    %30 = vector.broadcast %c7_i32 : i32 to vector<1x8x8xi32>
    %31 = arith.select %29, %25, %30 : vector<1x8x8xi1>, vector<1x8x8xi32>
    %cst_20 = arith.constant dense<2147483647> : vector<1x8xi32>
    %32 = vector.multi_reduction <minsi>, %31, %cst_20 [2] : vector<1x8x8xi32> to vector<1x8xi32>
    %c0_21 = arith.constant 0 : index
    %c0_22 = arith.constant 0 : index
    %c0_23 = arith.constant 0 : index
    %33 = vector.load %arg9[%c0_21, %c0_22, %c0_23] : memref<1x1x8xi32, #tpu.memory_space<vmem>>, vector<1x1x8xi32>
    %34 = vector.shape_cast %33 : vector<1x1x8xi32> to vector<1x8xi32>
    %35 = vector.shape_cast %32 : vector<1x8xi32> to vector<1x1x8xi32>
    tpu.vector_store %arg9[%c0_21, %c0_22, %c0_23], %35 {strides = array<i32>} : memref<1x1x8xi32, #tpu.memory_space<vmem>>, vector<1x1x8xi32>,
    return
  }
  func.func @transform_0(%arg0: i32) -> (i32, i32) {
    %c0_i32 = arith.constant 0 : i32
    %c0_i32_0 = arith.constant 0 : i32
    return %arg0, %c0_i32 : i32, i32
  }
  func.func @transform_1(%arg0: i32) -> (i32, i32) {
    %c0_i32 = arith.constant 0 : i32
    %c0_i32_0 = arith.constant 0 : i32
    %c0_i32_1 = arith.constant 0 : i32
    return %c0_i32, %c0_i32_0 : i32, i32
  }
  func.func @transform_2(%arg0: i32) -> (i32, i32) {
    %c0_i32 = arith.constant 0 : i32
    %c0_i32_0 = arith.constant 0 : i32
    %c0_i32_1 = arith.constant 0 : i32
    return %c0_i32, %c0_i32_0 : i32, i32
  }
  func.func @transform_3(%arg0: i32) -> (i32, i32) {
    %c0_i32 = arith.constant 0 : i32
    %c0_i32_0 = arith.constant 0 : i32
    %c0_i32_1 = arith.constant 0 : i32
    return %c0_i32, %c0_i32_0 : i32, i32
  }
  func.func @transform_4(%arg0: i32) -> (i32, i32) {
    %c0_i32 = arith.constant 0 : i32
    %c0_i32_0 = arith.constant 0 : i32
    %c0_i32_1 = arith.constant 0 : i32
    return %c0_i32, %c0_i32_0 : i32, i32
  }
  func.func @transform_5(%arg0: i32) -> (i32, i32) {
    %c0_i32 = arith.constant 0 : i32
    %c0_i32_0 = arith.constant 0 : i32
    %c0_i32_1 = arith.constant 0 : i32
    return %c0_i32, %c0_i32_0 : i32, i32
  }
  func.func @transform_6(%arg0: i32) -> (i32, i32) {
    %c0_i32 = arith.constant 0 : i32
    %c0_i32_0 = arith.constant 0 : i32
    %c0_i32_1 = arith.constant 0 : i32
    return %c0_i32, %c0_i32_0 : i32, i32
  }
  func.func @transform_7(%arg0: i32) -> (i32, i32) {
    %c0_i32 = arith.constant 0 : i32
    %c0_i32_0 = arith.constant 0 : i32
    return %arg0, %c0_i32 : i32, i32
  }
  func.func @transform_8(%arg0: i32) -> (i32, i32, i32) {
    %c0_i32 = arith.constant 0 : i32
    %c0_i32_0 = arith.constant 0 : i32
    %c0_i32_1 = arith.constant 0 : i32
    return %arg0, %c0_i32, %c0_i32_0 : i32, i32, i32
  }
}

</mosaic_0001>

<llo_original>
// kernel: tpu_custom_call.1
$region0: #{tpu_custom_call.1}
  #allocation0 [shape = 'u32[]', space=smem, size = 0x4, offset = 0x4, fixed_abs, tag = 'smem constant byte address 0x4 - core index']
  #allocation1 [shape = 'u32[144,128]{1,0:T(1,128)}', space=vmem, size = 0x12000, scoped, tag = 'internal scratch']
  %s0 = inlined_call_operand.vmem [shape: f32[8,32], index: 0, kind: input, shape index: {}]
  %s1 = inlined_call_operand.hbm [shape: bf16[32,64], index: 1, kind: input, shape index: {}]
  %s2 = inlined_call_operand.vmem [shape: f32[1,64], index: 2, kind: input, shape index: {}]
  %s3 = inlined_call_operand.vmem [shape: bf16[64,64], index: 3, kind: input, shape index: {}]
  %s4 = inlined_call_operand.vmem [shape: f32[1,64], index: 4, kind: input, shape index: {}]
  %s5 = inlined_call_operand.vmem [shape: bf16[64,8], index: 5, kind: input, shape index: {}]
  %s6 = inlined_call_operand.vmem [shape: f32[1,8], index: 6, kind: input, shape index: {}]
  %s7 = inlined_call_operand.hbm [shape: f32[8,8], index: 7, kind: output, shape index: {0}]
  %s8 = inlined_call_operand.hbm [shape: s32[1,1,8], index: 8, kind: output, shape index: {1}]
  %9 = xla_tuple %s7, %s8
  %s10 = sld [smem:[#allocation0]]
  $region50: #{tpu_custom_call.1} parent=0
    _
  %s12 = ssub.s32 1, %s10
  %s13 = scalar_select 0, %s12, %s10
  $region1: #{tpu_custom_call.1} parent=0
    #allocation2 [shape = 'u8[8192]{0}', space=vmem, size = 0x2000, scoped, tag = 'input window, operand 1, single buffered']
    #allocation3 [shape = 's32[1]{0}', space=sflag, size = 0x4, scoped, tag = 'scoped memory for tpu_custom_call.1']
    #allocation4 [shape = 's32[1]{0}', space=sflag, size = 0x4, scoped, tag = 'scoped memory for tpu_custom_call.1']
    #allocation5 [shape = 'u8[4096]{0}', space=vmem, size = 0x1000, scoped, tag = 'output window, operand 0, single buffered']
    #allocation6 [shape = 'u8[512]{0}', space=vmem, size = 0x400, scoped, tag = 'output window, operand 1, single buffered']
    #allocation7 [shape = 's32[1]{0}', space=sflag, size = 0x4, scoped, tag = 'scoped memory for tpu_custom_call.1']
    %14 = vsyncpa [#allocation3], 0
    %15 = vsyncpa [#allocation4], 0
    %16 = vsyncpa [#allocation7], 0
    // Predicated region
    $region2: #{tpu_custom_call.1} parent=1 // pred_check
      _
    $region3: #{tpu_custom_call.1} parent=1 // pred_check_branch
      %18 = sbr.rel (0) target = $region5
    $region4: #{tpu_custom_call.1} parent=1 // pred_region
      _
    $region5: #{tpu_custom_call.1} parent=1 // pred_fallthru
      _
    // Predicated region
    $region6: #{tpu_custom_call.1} parent=1 // pred_check
      _
    $region7: #{tpu_custom_call.1} parent=1 // pred_check_branch
      %20 = sbr.rel (0) target = $region9
    $region8: #{tpu_custom_call.1} parent=1 // pred_region
      %s22 = ssub.s32 256, 256
      %23 = vsyncadd [#allocation3], %s22
      %s24 = sshll.u32 [#allocation2], 4
      %s25 = int_to_ptr.vmem [resolvable:$true] %s24
      %30 = dma.hbm_to_vmem [thread:$0]  %s1, 256, %s25, [#allocation3], 64, 64, 4
    $region9: #{tpu_custom_call.1} parent=1 // pred_fallthru
      _
    // Predicated region
    $region10: #{tpu_custom_call.1} parent=1 // pred_check
      _
    $region11: #{tpu_custom_call.1} parent=1 // pred_check_branch
      %32 = sbr.rel (0) target = $region13
    $region12: #{tpu_custom_call.1} parent=1 // pred_region
      _
    $region13: #{tpu_custom_call.1} parent=1 // pred_fallthru
      _
    // Predicated region
    $region14: #{tpu_custom_call.1} parent=1 // pred_check
      _
    $region15: #{tpu_custom_call.1} parent=1 // pred_check_branch
      %34 = sbr.rel (0) target = $region17
    $region16: #{tpu_custom_call.1} parent=1 // pred_region
      _
    $region17: #{tpu_custom_call.1} parent=1 // pred_fallthru
      _
    // Predicated region
    $region18: #{tpu_custom_call.1} parent=1 // pred_check
      _
    $region19: #{tpu_custom_call.1} parent=1 // pred_check_branch
      %36 = sbr.rel (0) target = $region21
    $region20: #{tpu_custom_call.1} parent=1 // pred_region
      _
    $region21: #{tpu_custom_call.1} parent=1 // pred_fallthru
      _
    // Predicated region
    $region22: #{tpu_custom_call.1} parent=1 // pred_check
      _
    $region23: #{tpu_custom_call.1} parent=1 // pred_check_branch
      %38 = sbr.rel (0) target = $region25
    $region24: #{tpu_custom_call.1} parent=1 // pred_region
      _
    $region25: #{tpu_custom_call.1} parent=1 // pred_fallthru
      _
    // Predicated region
    $region26: #{tpu_custom_call.1} parent=1 // pred_check
      _
    $region27: #{tpu_custom_call.1} parent=1 // pred_check_branch
      %40 = sbr.rel (0) target = $region29
    $region28: #{tpu_custom_call.1} parent=1 // pred_region
      _
    $region29: #{tpu_custom_call.1} parent=1 // pred_fallthru
      _
    // Predicated region
    $region30: #{tpu_custom_call.1} parent=1 // pred_check
      _
    $region31: #{tpu_custom_call.1} parent=1 // pred_check_branch
      %42 = sbr.rel (0) target = $region33
    $region32: #{tpu_custom_call.1} parent=1 // pred_region
      %43 = dma.done [#allocation3], 256
    $region33: #{tpu_custom_call.1} parent=1 // pred_fallthru
      _
    %v45 = vld [vmem:[%s0] sm:$0xff]
    %v46 = vld [vmem:[#allocation2] sm:$0xf]
    %v47 = vld [vmem:[#allocation2 + $0x4] sm:$0xf]
    %v48 = vld [vmem:[#allocation2 + $0x8] sm:$0xf]
    %v49 = vld [vmem:[#allocation2 + $0xc] sm:$0xf]
    %v50 = vld [vmem:[%s2] sm:$0x1]
    %v51 = vpack.c.bf16 %v45, %v45
    %v53 = vlaneseq
    %v54 = vshrl.u32 %v53, 7
    %v55 = vsub.s32 0, %v54
    %v56 = vrot.slane %v50, %v55
    %v62 = vunpack.c.l.b16 %v46
    %v63 = vunpack.c.l.b16 %v47
    %v64 = vunpack.c.l.b16 %v48
    %v65 = vunpack.c.l.b16 %v49
    %v66 = vpack.c.b16 %v63, %v62
    %v67 = vpack.c.b16 %v65, %v64
    %vm70 = vcmask 261120
    %v72 = vsel %vm70, %v51, 0
    %74 = vmatprep.subr.bf16.mxu0 0
    %75 = vmatpush1.bf16.msra.mxu0 %v66
    %76 = vmatprep.subr.bf16.mxu0 0
    %77 = vmatpush1.bf16.msra.mxu0 %v67
    %78 = vmatprep.subr.bf16.mxu0 0
    %79 = vmatpush1.bf16.msra.mxu0 0
    %80 = vmatprep.subr.bf16.mxu0 0
    %81 = vmatpush1.bf16.msra.mxu0 0
    %82 = vmatprep.subr.bf16.mxu0 0
    %83 = vmatpush1.bf16.msra.mxu0 0
    %84 = vmatprep.subr.bf16.mxu0 0
    %85 = vmatpush1.bf16.msra.mxu0 0
    %86 = vmatprep.subr.bf16.mxu0 0
    %87 = vmatpush1.bf16.msra.mxu0 0
    %88 = vmatprep.subr.bf16.mxu0 0
    %89 = vmatpush1.bf16.msra.mxu0 0
    %90 = vmatprep.subr.bf16.mxu0 0
    %91 = vmatpush1.bf16.msra.mxu0 0
    %92 = vmatprep.subr.bf16.mxu0 0
    %93 = vmatpush1.bf16.msra.mxu0 0
    %94 = vmatprep.subr.bf16.mxu0 0
    %95 = vmatpush1.bf16.msra.mxu0 0
    %96 = vmatprep.subr.bf16.mxu0 0
    %97 = vmatpush1.bf16.msra.mxu0 0
    %98 = vmatprep.subr.bf16.mxu0 0
    %99 = vmatpush1.bf16.msra.mxu0 0
    %100 = vmatprep.subr.bf16.mxu0 0
    %101 = vmatpush1.bf16.msra.mxu0 0
    %102 = vmatprep.subr.bf16.mxu0 0
    %103 = vmatpush1.bf16.msra.mxu0 0
    %104 = vmatprep.subr.bf16.mxu0 0
    %105 = vmatpush1.bf16.msra.mxu0 0
    %106 = vmatprep.mubr.bf16.mxu0 0
    %107 = vmatmul.mubr.bf16.gmra.mrb[0].mxu0 %v72
    %v108 = vpop.f32.mrb[0].mxu0
    %v109 = vadd.f32 %v56, %v108
    %v110 = vpop.f32.mrb[0].mxu0
    %v111 = vpop.f32.mrb[0].mxu0
    %v112 = vpop.f32.mrb[0].mxu0
    %113 = vdwg.mxu0
    %v114 = vmax.f32 %v109, 0.0
    %v115 = vld [vmem:[%s3] sm:$0xf]
    %v116 = vld [vmem:[%s3 + $0x4] sm:$0xf]
    %v117 = vld [vmem:[%s3 + $0x8] sm:$0xf]
    %v118 = vld [vmem:[%s3 + $0xc] sm:$0xf]
    %v119 = vld [vmem:[%s3 + $0x10] sm:$0xf]
    %v120 = vld [vmem:[%s3 + $0x14] sm:$0xf]
    %v121 = vld [vmem:[%s3 + $0x18] sm:$0xf]
    %v122 = vld [vmem:[%s3 + $0x1c] sm:$0xf]
    %v123 = vld [vmem:[%s4] sm:$0x1]
    %v124 = vpack.c.bf16 %v114, %v114
    %v126 = vlaneseq
    %v127 = vshrl.u32 %v126, 7
    %v128 = vsub.s32 0, %v127
    %v129 = vrot.slane %v123, %v128
    %v139 = vunpack.c.l.b16 %v115
    %v140 = vunpack.c.l.b16 %v116
    %v141 = vunpack.c.l.b16 %v117
    %v142 = vunpack.c.l.b16 %v118
    %v143 = vunpack.c.l.b16 %v119
    %v144 = vunpack.c.l.b16 %v120
    %v145 = vunpack.c.l.b16 %v121
    %v146 = vunpack.c.l.b16 %v122
    %v147 = vpack.c.b16 %v140, %v139
    %v148 = vpack.c.b16 %v142, %v141
    %v149 = vpack.c.b16 %v144, %v143
    %v150 = vpack.c.b16 %v146, %v145
    %vm155 = vcmask 523264
    %v157 = vsel %vm155, %v124, 0
    %159 = vmatprep.subr.bf16.mxu0 0
    %160 = vmatpush1.bf16.msra.mxu0 %v147
    %161 = vmatprep.subr.bf16.mxu0 0
    %162 = vmatpush1.bf16.msra.mxu0 %v148
    %163 = vmatprep.subr.bf16.mxu0 0
    %164 = vmatpush1.bf16.msra.mxu0 %v149
    %165 = vmatprep.subr.bf16.mxu0 0
    %166 = vmatpush1.bf16.msra.mxu0 %v150
    %167 = vmatprep.subr.bf16.mxu0 0
    %168 = vmatpush1.bf16.msra.mxu0 0
    %169 = vmatprep.subr.bf16.mxu0 0
    %170 = vmatpush1.bf16.msra.mxu0 0
    %171 = vmatprep.subr.bf16.mxu0 0
    %172 = vmatpush1.bf16.msra.mxu0 0
    %173 = vmatprep.subr.bf16.mxu0 0
    %174 = vmatpush1.bf16.msra.mxu0 0
    %175 = vmatprep.subr.bf16.mxu0 0
    %176 = vmatpush1.bf16.msra.mxu0 0
    %177 = vmatprep.subr.bf16.mxu0 0
    %178 = vmatpush1.bf16.msra.mxu0 0
    %179 = vmatprep.subr.bf16.mxu0 0
    %180 = vmatpush1.bf16.msra.mxu0 0
    %181 = vmatprep.subr.bf16.mxu0 0
    %182 = vmatpush1.bf16.msra.mxu0 0
    %183 = vmatprep.subr.bf16.mxu0 0
    %184 = vmatpush1.bf16.msra.mxu0 0
    %185 = vmatprep.subr.bf16.mxu0 0
    %186 = vmatpush1.bf16.msra.mxu0 0
    %187 = vmatprep.subr.bf16.mxu0 0
    %188 = vmatpush1.bf16.msra.mxu0 0
    %189 = vmatprep.subr.bf16.mxu0 0
    %190 = vmatpush1.bf16.msra.mxu0 0
    %191 = vmatprep.mubr.bf16.mxu0 0
    %192 = vmatmul.mubr.bf16.gmra.mrb[0].mxu0 %v157
    %v193 = vpop.f32.mrb[0].mxu0
    %v194 = vadd.f32 %v129, %v193
    %v195 = vpop.f32.mrb[0].mxu0
    %v196 = vpop.f32.mrb[0].mxu0
    %v197 = vpop.f32.mrb[0].mxu0
    %198 = vdwg.mxu0
    %v199 = vmax.f32 %v194, 0.0
    %v200 = vld [vmem:[%s5] sm:$0xf]
    %v201 = vld [vmem:[%s5 + $0x4] sm:$0xf]
    %v202 = vld [vmem:[%s5 + $0x8] sm:$0xf]
    %v203 = vld [vmem:[%s5 + $0xc] sm:$0xf]
    %v204 = vld [vmem:[%s5 + $0x10] sm:$0xf]
    %v205 = vld [vmem:[%s5 + $0x14] sm:$0xf]
    %v206 = vld [vmem:[%s5 + $0x18] sm:$0xf]
    %v207 = vld [vmem:[%s5 + $0x1c] sm:$0xf]
    %v208 = vld [vmem:[%s6] sm:$0x1]
    %v209 = vpack.c.bf16 %v199, %v199
    %v211 = vlaneseq
    %v212 = vshrl.u32 %v211, 7
    %v213 = vsub.s32 0, %v212
    %v214 = vrot.slane %v208, %v213
    %v224 = vunpack.c.l.b16 %v200
    %v225 = vunpack.c.l.b16 %v201
    %v226 = vunpack.c.l.b16 %v202
    %v227 = vunpack.c.l.b16 %v203
    %v228 = vunpack.c.l.b16 %v204
    %v229 = vunpack.c.l.b16 %v205
    %v230 = vunpack.c.l.b16 %v206
    %v231 = vunpack.c.l.b16 %v207
    %v232 = vpack.c.b16 %v225, %v224
    %v233 = vpack.c.b16 %v227, %v226
    %v234 = vpack.c.b16 %v229, %v228
    %v235 = vpack.c.b16 %v231, %v230
    %v241 = vsel %vm155, %v209, 0
    %243 = vmatprep.subr.bf16.mxu0 0
    %244 = vmatpush1.bf16.msra.mxu0 %v232
    %245 = vmatprep.subr.bf16.mxu0 0
    %246 = vmatpush1.bf16.msra.mxu0 %v233
    %247 = vmatprep.subr.bf16.mxu0 0
    %248 = vmatpush1.bf16.msra.mxu0 %v234
    %249 = vmatprep.subr.bf16.mxu0 0
    %250 = vmatpush1.bf16.msra.mxu0 %v235
    %251 = vmatprep.subr.bf16.mxu0 0
    %252 = vmatpush1.bf16.msra.mxu0 0
    %253 = vmatprep.subr.bf16.mxu0 0
    %254 = vmatpush1.bf16.msra.mxu0 0
    %255 = vmatprep.subr.bf16.mxu0 0
    %256 = vmatpush1.bf16.msra.mxu0 0
    %257 = vmatprep.subr.bf16.mxu0 0
    %258 = vmatpush1.bf16.msra.mxu0 0
    %259 = vmatprep.subr.bf16.mxu0 0
    %260 = vmatpush1.bf16.msra.mxu0 0
    %261 = vmatprep.subr.bf16.mxu0 0
    %262 = vmatpush1.bf16.msra.mxu0 0
    %263 = vmatprep.subr.bf16.mxu0 0
    %264 = vmatpush1.bf16.msra.mxu0 0
    %265 = vmatprep.subr.bf16.mxu0 0
    %266 = vmatpush1.bf16.msra.mxu0 0
    %267 = vmatprep.subr.bf16.mxu0 0
    %268 = vmatpush1.bf16.msra.mxu0 0
    %269 = vmatprep.subr.bf16.mxu0 0
    %270 = vmatpush1.bf16.msra.mxu0 0
    %271 = vmatprep.subr.bf16.mxu0 0
    %272 = vmatpush1.bf16.msra.mxu0 0
    %273 = vmatprep.subr.bf16.mxu0 0
    %274 = vmatpush1.bf16.msra.mxu0 0
    %275 = vmatprep.mubr.bf16.mxu0 0
    %276 = vmatmul.mubr.bf16.gmra.mrb[0].mxu0 %v241
    %v277 = vpop.f32.mrb[0].mxu0
    %v278 = vadd.f32 %v214, %v277
    %v279 = vpop.f32.mrb[0].mxu0
    %v280 = vpop.f32.mrb[0].mxu0
    %v281 = vpop.f32.mrb[0].mxu0
    %282 = vdwg.mxu0
    %vm283 = vcmask 64512
    %284 = vst.msk [vmem:[#allocation5] sm:$0xff] %vm283, %v278
    %v285 = vlaneseq
    %v286 = vand.u32 %v285, 127
    %v287 = vsel %vm283, %v278, -inf
    %288 = vmax.xlane.f32.xlu0 %v287
    %v289 = vpop.xlane.xlu0 %288
    %vm290 = vcmp.eq.f32.partialorder %v278, %v289
    %v291 = vsel %vm290, %v286, 7
    %v292 = vsel %vm283, %v291, 2147483647
    %v293 = vand.u32 %v292, 65535
    %v294 = vshra.s32 %v292, 16
    %v295 = vcvt.s32.f32 %v293
    %v296 = vcvt.s32.f32 %v294
    %297 = vmin.xlane.f32.xlu0 %v296
    %v298 = vpop.xlane.xlu0 %297
    %vm299 = vcmp.eq.f32.partialorder %v296, %v298
    %v300 = vsel %vm299, %v295, inf
    %301 = vmin.xlane.f32.xlu0 %v300
    %v302 = vpop.xlane.xlu0 %301
    %v303 = vcvt.f32.s32 %v302
    %v304 = vcvt.f32.s32 %v298
    %v305 = vshll.u32 %v304, 16
    %v306 = vadd.s32 %v305, %v303
    %v307 = vlaneseq
    %v308 = vshrl.u32 %v307, 7
    %v309 = vsub.s32 %v286, %v308
    %v310 = vrot.slane %v306, %v309
    %vm311 = vcmask 57344
    %312 = vst.msk [vmem:[#allocation6] sm:$0x1] %vm311, %v310
    // Predicated region
    $region34: #{tpu_custom_call.1} parent=1 // pred_check
      _
    $region35: #{tpu_custom_call.1} parent=1 // pred_check_branch
      %314 = sbr.rel (0) target = $region37
    $region36: #{tpu_custom_call.1} parent=1 // pred_region
      %s316 = ssub.s32 128, 128
      %317 = vsyncadd [#allocation4], %s316
      %s319 = sshll.u32 [#allocation5], 4
      %s320 = int_to_ptr.vmem [resolvable:$true] %s319
      %322 = dma.vmem_to_hbm [thread:$0]  %s320, 128, %s7, [#allocation4]
    $region37: #{tpu_custom_call.1} parent=1 // pred_fallthru
      _
    // Predicated region
    $region38: #{tpu_custom_call.1} parent=1 // pred_check
      _
    $region39: #{tpu_custom_call.1} parent=1 // pred_check_branch
      %324 = sbr.rel (0) target = $region41
    $region40: #{tpu_custom_call.1} parent=1 // pred_region
      %s326 = ssub.s32 16, 16
      %327 = vsyncadd [#allocation7], %s326
      %s329 = sshll.u32 [#allocation6], 4
      %s330 = int_to_ptr.vmem [resolvable:$true] %s329
      %332 = dma.vmem_to_hbm [thread:$0]  %s330, 16, %s8, [#allocation7]
    $region41: #{tpu_custom_call.1} parent=1 // pred_fallthru
      _
    // Predicated region
    $region42: #{tpu_custom_call.1} parent=1 // pred_check
      _
    $region43: #{tpu_custom_call.1} parent=1 // pred_check_branch
      %334 = sbr.rel (0) target = $region45
    $region44: #{tpu_custom_call.1} parent=1 // pred_region
      %335 = dma.done [#allocation4], 128
    $region45: #{tpu_custom_call.1} parent=1 // pred_fallthru
      _
    // Predicated region
    $region46: #{tpu_custom_call.1} parent=1 // pred_check
      _
    $region47: #{tpu_custom_call.1} parent=1 // pred_check_branch
      %337 = sbr.rel (0) target = $region49
    $region48: #{tpu_custom_call.1} parent=1 // pred_region
      %338 = dma.done [#allocation7], 16
    $region49: #{tpu_custom_call.1} parent=1 // pred_fallthru
      _
    %339 = vsyncpa [#allocation3], 1
    %340 = vsyncpa [#allocation4], 1
    %341 = vsyncpa [#allocation7], 1

</llo_original>
